<compile_context>
chip_gen: v6e
topology: v6e:2x2x1
jax: 0.10.0
libtpu: 0.0.40
codegen_flags: <defaults>
</compile_context>

<pallas_src>
import jax
import jax.numpy as jnp
from jax.experimental import pallas as pl
from jax.experimental.pallas import tpu as pltpu


def _td_loss_kernel(w_ref, rlast_ref, v_ref, vnext_ref, o_ref):
    """o = weight * (v[:, :-1] - v_next_with_last_col_replaced)^2 for one batch tile.

    w_ref      : SMEM (1,)        float32 scalar weight
    rlast_ref  : VMEM [TB, 1]     r[:, -1]  (only the last reward column is DMA'd)
    v_ref      : VMEM [TB, S]
    vnext_ref  : VMEM [TB, S-1]
    o_ref      : VMEM [TB, S-1]
    """
    Sm1 = o_ref.shape[-1]
    w = w_ref[0]

    # Bulk of the block: full-width, unmasked, lane-dense store.
    diff = v_ref[:, :Sm1] - vnext_ref[...]
    o_ref[...] = (w * diff * diff).astype(o_ref.dtype)

    # Patch only the last column, where the torch code does v_next[:, -1] = r[:, -1].
    d_last = v_ref[:, Sm1 - 1:Sm1] - rlast_ref[...]
    o_ref[:, Sm1 - 1:Sm1] = (w * d_last * d_last).astype(o_ref.dtype)


def _pick_batch_tile(B, S, itemsize, vmem_budget_bytes=12 * 1024 * 1024):
    """Largest multiple-of-8 batch tile whose double-buffered working set fits VMEM.

    Per grid step VMEM ~= 2 (double buffer) * (v + v_next + out + r_last)
                       ~= 2 * 3 * TB * S * itemsize.
    A ~12 MiB budget stays under v5e's 16 MiB default scoped VMEM (and far under
    v6e/v7x's 32 MiB), preserving full double-buffered DMA/compute overlap.
    """
    tb = vmem_budget_bytes // max(1, 6 * S * itemsize)
    tb = (tb // 8) * 8
    tb = max(8, tb)
    return min(B, tb)


def td_loss(r, v, v_next, weight=1.0, gamma=0.99, batch_tile=None):
    """Pallas TD loss.  r: [B,S], v: [B,S], v_next: [B,S-1] -> [B,S-1]."""
    del gamma  # unused in the reference forward pass
    B, S = v.shape
    Sm1 = S - 1
    assert r.shape == (B, S)
    assert v_next.shape == (B, Sm1)
    assert Sm1 >= 1

    out_dtype = jnp.result_type(v.dtype, v_next.dtype)
    itemsize = jnp.dtype(out_dtype).itemsize

    # Only the last reward column is ever read -> do not DMA the full r tensor.
    r_last = r[:, Sm1:S]  # [B, 1]

    tb = batch_tile if batch_tile is not None else _pick_batch_tile(B, S, itemsize)
    tb = min(tb, B)
    grid = (pl.cdiv(B, tb),)

    w = jnp.asarray([weight], dtype=jnp.float32)

    cost = pl.CostEstimate(
        flops=3 * B * Sm1,
        transcendentals=0,
        bytes_accessed=(B * S + 2 * B * Sm1 + B) * itemsize,
    )

    return pl.pallas_call(
        _td_loss_kernel,
        out_shape=jax.ShapeDtypeStruct((B, Sm1), out_dtype),
        grid=grid,
        in_specs=[
            pl.BlockSpec(memory_space=pltpu.SMEM),          # weight scalar
            pl.BlockSpec((tb, 1), lambda i: (i, 0)),        # r[:, -1]
            pl.BlockSpec((tb, S), lambda i: (i, 0)),        # v
            pl.BlockSpec((tb, Sm1), lambda i: (i, 0)),      # v_next
        ],
        out_specs=pl.BlockSpec((tb, Sm1), lambda i: (i, 0)),
        compiler_params=pltpu.CompilerParams(
            dimension_semantics=("parallel",),
        ),
        cost_estimate=cost,
    )(w, r_last, v, v_next)


def td_loss_ref(r, v, v_next, weight=1.0):
    """Pure-JAX reference mirroring the PyTorch code."""
    V = v[:, :-1]
    v_next_det = v_next.at[:, -1].set(r[:, -1])
    return weight * (V - v_next_det) ** 2


if __name__ == "__main__":
    key = jax.random.PRNGKey(0)

    def run_case(B, S, weight=1.0, batch_tile=None):
        k1, k2, k3 = jax.random.split(jax.random.fold_in(key, B * 1000 + S), 3)
        r = jax.random.normal(k1, (B, S), dtype=jnp.float32)
        v = jax.random.normal(k2, (B, S), dtype=jnp.float32)
        v_next = jax.random.normal(k3, (B, S - 1), dtype=jnp.float32)

        out = td_loss(r, v, v_next, weight=weight, gamma=0.99, batch_tile=batch_tile)
        out = jax.block_until_ready(out)

        ref = td_loss_ref(r, v, v_next, weight=weight)
        assert out.shape == (B, S - 1)
        assert jnp.allclose(out, ref, atol=1e-6), (B, S)

    # Small shape implied by the module (batch=2, seq=8): single block, full-array dims.
    run_case(2, 8)
    # Larger case exercising the tiled, double-buffered multi-step grid + non-unit weight.
    run_case(16, 136, weight=0.5, batch_tile=8)

    print("KERNEL_OK")
</pallas_src>

<mosaic_0001>
module attributes {stable_mosaic.version = 11 : i64} {
  func.func @_td_loss_kernel(%arg0: i32, %arg1: memref<1xf32, #tpu.memory_space<smem>>, %arg2: memref<2x1xf32, #tpu.memory_space<vmem>>, %arg3: memref<2x8xf32, #tpu.memory_space<vmem>>, %arg4: memref<2x7xf32, #tpu.memory_space<vmem>>, %arg5: memref<2x7xf32, #tpu.memory_space<vmem>>) attributes {dimension_semantics = [#tpu.dimension_semantics<parallel>], iteration_bounds = array<i64: 1>, scalar_prefetch = 0 : i64, scratch_operands = 0 : i64, tpu.core_type = #tpu.core_type<tc>, window_params = [{transform_indices = @transform_0, window_bounds = array<i64: 1>}, {transform_indices = @transform_1, window_bounds = array<i64: 2, 1>}, {transform_indices = @transform_2, window_bounds = array<i64: 2, 8>}, {transform_indices = @transform_3, window_bounds = array<i64: 2, 7>}, {transform_indices = @transform_4, window_bounds = array<i64: 2, 7>}]} {
    %c0 = arith.constant 0 : index
    %0 = memref.load %arg1[%c0] : memref<1xf32, #tpu.memory_space<smem>>
    %c0_0 = arith.constant 0 : index
    %c0_1 = arith.constant 0 : index
    %1 = vector.load %arg3[%c0_0, %c0_1] : memref<2x8xf32, #tpu.memory_space<vmem>>, vector<2x7xf32>
    %c0_2 = arith.constant 0 : index
    %c0_3 = arith.constant 0 : index
    %2 = vector.load %arg4[%c0_2, %c0_3] : memref<2x7xf32, #tpu.memory_space<vmem>>, vector<2x7xf32>
    %3 = arith.subf %1, %2 : vector<2x7xf32>
    %4 = vector.broadcast %0 : f32 to vector<2x7xf32>
    %5 = arith.mulf %4, %3 : vector<2x7xf32>
    %6 = arith.mulf %5, %3 : vector<2x7xf32>
    %c0_4 = arith.constant 0 : index
    %c0_5 = arith.constant 0 : index
    %7 = vector.load %arg5[%c0_4, %c0_5] : memref<2x7xf32, #tpu.memory_space<vmem>>, vector<2x7xf32>
    tpu.vector_store %arg5[%c0_4, %c0_5], %6 {strides = array<i32>} : memref<2x7xf32, #tpu.memory_space<vmem>>, vector<2x7xf32>,
    %c0_6 = arith.constant 0 : index
    %c6 = arith.constant 6 : index
    %8 = vector.load %arg3[%c0_6, %c6] : memref<2x8xf32, #tpu.memory_space<vmem>>, vector<2x1xf32>
    %c0_7 = arith.constant 0 : index
    %c0_8 = arith.constant 0 : index
    %9 = vector.load %arg2[%c0_7, %c0_8] : memref<2x1xf32, #tpu.memory_space<vmem>>, vector<2x1xf32>
    %10 = arith.subf %8, %9 : vector<2x1xf32>
    %11 = vector.broadcast %0 : f32 to vector<2x1xf32>
    %12 = arith.mulf %11, %10 : vector<2x1xf32>
    %13 = arith.mulf %12, %10 : vector<2x1xf32>
    %c0_9 = arith.constant 0 : index
    %c6_10 = arith.constant 6 : index
    %14 = vector.load %arg5[%c0_9, %c6_10] : memref<2x7xf32, #tpu.memory_space<vmem>>, vector<2x1xf32>
    tpu.vector_store %arg5[%c0_9, %c6_10], %13 {strides = array<i32>} : memref<2x7xf32, #tpu.memory_space<vmem>>, vector<2x1xf32>,
    return
  }
  func.func @transform_0(%arg0: i32) -> i32 {
    %c0_i32 = arith.constant 0 : i32
    %c0_i32_0 = arith.constant 0 : i32
    return %c0_i32 : i32
  }
  func.func @transform_1(%arg0: i32) -> (i32, i32) {
    %c0_i32 = arith.constant 0 : i32
    %c0_i32_0 = arith.constant 0 : i32
    return %arg0, %c0_i32 : i32, i32
  }
  func.func @transform_2(%arg0: i32) -> (i32, i32) {
    %c0_i32 = arith.constant 0 : i32
    %c0_i32_0 = arith.constant 0 : i32
    return %arg0, %c0_i32 : i32, i32
  }
  func.func @transform_3(%arg0: i32) -> (i32, i32) {
    %c0_i32 = arith.constant 0 : i32
    %c0_i32_0 = arith.constant 0 : i32
    return %arg0, %c0_i32 : i32, i32
  }
  func.func @transform_4(%arg0: i32) -> (i32, i32) {
    %c0_i32 = arith.constant 0 : i32
    %c0_i32_0 = arith.constant 0 : i32
    return %arg0, %c0_i32 : i32, i32
  }
}

</mosaic_0001>

<llo_original>
// kernel: tpu_custom_call.1
$region0: #{tpu_custom_call.1}
  #allocation0 [shape = 'u32[]', space=smem, size = 0x4, offset = 0x4, fixed_abs, tag = 'smem constant byte address 0x4 - core index']
  #allocation1 [shape = 'u32[144,128]{1,0:T(1,128)}', space=vmem, size = 0x12000, scoped, tag = 'internal scratch']
  #allocation2 [shape = 'f32[1]{0:T(128)S(6)}', space=smem, size = 0x200, scoped, tag = 'scoped memory for tpu_custom_call.1']
  %s0 = inlined_call_operand.<no memory space> [shape: f32[1], index: 0, kind: input, shape index: {}]
  %s1 = inlined_call_operand.vmem [shape: f32[2,1], index: 1, kind: input, shape index: {}]
  %s2 = inlined_call_operand.vmem [shape: f32[2,8], index: 2, kind: input, shape index: {}]
  %s3 = inlined_call_operand.vmem [shape: f32[2,7], index: 3, kind: input, shape index: {}]
  %s4 = inlined_call_operand.hbm [shape: f32[2,7], index: 4, kind: output, shape index: {}]
  %s5 = sld [smem:[#allocation0]]
  $region26: #{tpu_custom_call.1} parent=0
    _
  %s7 = ssub.s32 1, %s5
  %s8 = scalar_select 0, %s7, %s5
  %9 = sst [smem:[#allocation2]] %s0
  $region1: #{tpu_custom_call.1} parent=0
    #allocation3 [shape = 'u8[1024]{0}', space=vmem, size = 0x400, scoped, tag = 'output window, operand 0, single buffered']
    #allocation4 [shape = 's32[1]{0}', space=sflag, size = 0x4, scoped, tag = 'scoped memory for tpu_custom_call.1']
    %10 = vsyncpa [#allocation4], 0
    // Predicated region
    $region2: #{tpu_custom_call.1} parent=1 // pred_check
      _
    $region3: #{tpu_custom_call.1} parent=1 // pred_check_branch
      %12 = sbr.rel (0) target = $region5
    $region4: #{tpu_custom_call.1} parent=1 // pred_region
      _
    $region5: #{tpu_custom_call.1} parent=1 // pred_fallthru
      _
    // Predicated region
    $region6: #{tpu_custom_call.1} parent=1 // pred_check
      _
    $region7: #{tpu_custom_call.1} parent=1 // pred_check_branch
      %14 = sbr.rel (0) target = $region9
    $region8: #{tpu_custom_call.1} parent=1 // pred_region
      _
    $region9: #{tpu_custom_call.1} parent=1 // pred_fallthru
      _
    // Predicated region
    $region10: #{tpu_custom_call.1} parent=1 // pred_check
      _
    $region11: #{tpu_custom_call.1} parent=1 // pred_check_branch
      %16 = sbr.rel (0) target = $region13
    $region12: #{tpu_custom_call.1} parent=1 // pred_region
      _
    $region13: #{tpu_custom_call.1} parent=1 // pred_fallthru
      _
    // Predicated region
    $region14: #{tpu_custom_call.1} parent=1 // pred_check
      _
    $region15: #{tpu_custom_call.1} parent=1 // pred_check_branch
      %18 = sbr.rel (0) target = $region17
    $region16: #{tpu_custom_call.1} parent=1 // pred_region
      _
    $region17: #{tpu_custom_call.1} parent=1 // pred_fallthru
      _
    %s19 = sld [smem:[#allocation2]]
    %v20 = vld [vmem:[%s2] sm:$0x3]
    %v21 = vld [vmem:[%s3] sm:$0x3]
    %v22 = vsub.f32 %v20, %v21
    %v23 = vstv %s19
    %v24 = vmul.f32 %v23, %v22
    %v25 = vmul.f32 %v24, %v22
    %vm26 = vcmask 50176
    %27 = vst.msk [vmem:[#allocation3] sm:$0x3] %vm26, %v25
    %v28 = vld [vmem:[%s2] sm:$0x3]
    %v29 = vld [vmem:[%s1] sm:$0x3]
    %31 = vrot.lane.b32.xlu0 %v29, 6
    %v32 = vpop.permute.xlu0 %31
    %v34 = vsub.f32 %v28, %v32
    %v35 = vmul.f32 %v23, %v34
    %v36 = vmul.f32 %v35, %v34
    %vm37 = vcmask 50224
    %38 = vst.msk [vmem:[#allocation3] sm:$0x3] %vm37, %v36
    // Predicated region
    $region18: #{tpu_custom_call.1} parent=1 // pred_check
      _
    $region19: #{tpu_custom_call.1} parent=1 // pred_check_branch
      %40 = sbr.rel (0) target = $region21
    $region20: #{tpu_custom_call.1} parent=1 // pred_region
      %s42 = ssub.s32 32, 32
      %43 = vsyncadd [#allocation4], %s42
      %s45 = sshll.u32 [#allocation3], 4
      %s46 = int_to_ptr.vmem [resolvable:$true] %s45
      %48 = dma.vmem_to_hbm [thread:$0]  %s46, 32, %s4, [#allocation4]
    $region21: #{tpu_custom_call.1} parent=1 // pred_fallthru
      _
    // Predicated region
    $region22: #{tpu_custom_call.1} parent=1 // pred_check
      _
    $region23: #{tpu_custom_call.1} parent=1 // pred_check_branch
      %50 = sbr.rel (0) target = $region25
    $region24: #{tpu_custom_call.1} parent=1 // pred_region
      %51 = dma.done [#allocation4], 32
    $region25: #{tpu_custom_call.1} parent=1 // pred_fallthru
      _
    %52 = vsyncpa [#allocation4], 1

</llo_original>
